<compile_context>
chip_gen: v6e
topology: v6e:2x2x1
jax: 0.10.0
libtpu: 0.0.40
codegen_flags: <defaults>
</compile_context>

<pallas_src>
import jax
import jax.numpy as jnp
from jax import lax
from jax.experimental import pallas as pl
from jax.experimental.pallas import tpu as pltpu

LANES = 128


def _round_up(x, m):
    return (x + m - 1) // m * m


def _vmem_budget_bytes():
    """Per-generation usable VMEM budget (leave headroom for XLA scratch)."""
    try:
        cap = int(pltpu.get_tpu_info().vmem_capacity_bytes)
    except Exception:
        cap = 64 << 20                      # conservative fallback (v7x size)
    # ~3/4 of physical: ~48 MiB on v7x (64 MiB), ~96 MiB on v5e/v6e (128 MiB).
    return min(cap * 3 // 4, 100 << 20)


# ----------------------------- Pallas kernel ------------------------------ #
def _mtl_matmul_kernel(x_ref, w_ref, b_ref, o_ref):
    # x_ref: (TR, Dp)  w_ref: (Dp, Mp)  b_ref: (1, Mp) f32  o_ref: (TR, Mp)
    acc = jnp.dot(x_ref[...], w_ref[...], preferred_element_type=jnp.float32)
    o_ref[...] = (acc + b_ref[...]).astype(o_ref.dtype)


def _pallas_matmul_bias(patches, w_p, b_p, M, D):
    """(R, D) patches @ padded (Dp, Mp) weight + bias -> (R, M) float32."""
    R = patches.shape[0]
    D_pad, m_pad = w_p.shape
    cdt = w_p.dtype
    itemsize = jnp.dtype(cdt).itemsize
    out_dtype = cdt                      # bf16 output halves write traffic
    out_itemsize = jnp.dtype(out_dtype).itemsize
    sub = 16 if itemsize == 2 else 8     # sublane packing granularity

    # --- row-tile selection: biggest tile fitting the per-generation budget.
    budget = _vmem_budget_bytes()
    # weight/bias block index is constant -> DMA'd once, but still occupies
    # double buffers; account for that in the fixed footprint.
    fixed = 2 * (D_pad * m_pad * itemsize + m_pad * 4)
    per_row = 2 * (D_pad * itemsize + m_pad * out_itemsize)
    avail = max(budget - fixed - (4 << 20), per_row * sub)
    max_tr = max(sub, (avail // per_row) // sub * sub)

    if R <= sub:
        tr = sub
    elif R <= 1024:
        # >=2 grid steps once R is non-trivial so the "parallel" axis shards
        # across v7x's two TensorCores and the pipeline has DMA to overlap.
        target = pl.cdiv(R, 2) if R >= 128 else R
        tr = min(_round_up(target, sub), max_tr)
    else:
        tr = min(max_tr, 1024, _round_up(pl.cdiv(R, 2), sub))
    tr = max(sub, tr)
    r_pad = _round_up(R, tr)

    patches = patches.astype(cdt)
    if r_pad != R or D_pad != patches.shape[1]:
        patches = jnp.pad(patches,
                          ((0, r_pad - R), (0, D_pad - patches.shape[1])))

    vmem_needed = fixed + tr * per_row + (4 << 20)
    vmem_limit = int(min(max(vmem_needed, 16 << 20), budget))

    cost = pl.CostEstimate(
        flops=2 * R * D * M,                                 # true work
        transcendentals=0,
        bytes_accessed=(r_pad * D_pad + D_pad * m_pad) * itemsize
        + m_pad * 4 + r_pad * m_pad * out_itemsize,
    )

    out = pl.pallas_call(
        _mtl_matmul_kernel,
        out_shape=jax.ShapeDtypeStruct((r_pad, m_pad), out_dtype),
        grid_spec=pl.GridSpec(
            grid=(r_pad // tr,),
            in_specs=[
                pl.BlockSpec((tr, D_pad), lambda i: (i, 0)),
                pl.BlockSpec((D_pad, m_pad), lambda i: (0, 0)),
                pl.BlockSpec((1, m_pad), lambda i: (0, 0)),
            ],
            out_specs=pl.BlockSpec((tr, m_pad), lambda i: (i, 0)),
        ),
        compiler_params=pltpu.CompilerParams(
            dimension_semantics=("parallel",),
            vmem_limit_bytes=vmem_limit,
        ),
        cost_estimate=cost,
    )(patches, w_p, b_p)

    return out[:R, :M].astype(jnp.float32)


# --------------------------- parameter prep ------------------------------- #
def prepare_multitask_params(weight, bias, num_classes,
                             compute_dtype=jnp.bfloat16):
    """Precompute the transposed / padded weight & bias once (static params).

    weight : (num_classes*2, Cx, K, K)  Conv2d weight (groups=num_classes)
    bias   : (num_classes*2,)
    compute_dtype : bf16 by default (full-rate on v5e/v6e/v7x MXUs, f32
                    accumulation); pass jnp.float32 for exact parity.
    """
    M, Cx, KH, KW = weight.shape
    assert M == num_classes * 2
    D = Cx * KH * KW
    D_pad = _round_up(D, LANES)          # dense contraction dim (DMA/MXU feed)
    m_pad = _round_up(M, LANES)          # lane-dense output (unmasked vst)
    w_t = weight.reshape(M, D).T.astype(compute_dtype)       # (D, M)
    w_p = jnp.zeros((D_pad, m_pad), compute_dtype).at[:D, :M].set(w_t)
    b_p = jnp.zeros((1, m_pad), jnp.float32).at[:, :M].set(
        bias.astype(jnp.float32).reshape(1, M))
    return dict(w_p=w_p, b_p=b_p, M=M, D=D, Cx=Cx, KH=KH, KW=KW,
                num_classes=num_classes)


# ------------------------------ module glue ------------------------------- #
def multitask_block_forward(x, params):
    """x: (N, Cx, H, W) NCHW float32. Returns (-1, num_classes, 2) float32."""
    N, Cx, H, W = x.shape
    assert Cx == params["Cx"]
    KH, KW = params["KH"], params["KW"]
    M, D, num_classes = params["M"], params["D"], params["num_classes"]
    OH, OW = H - KH + 1, W - KW + 1

    if OH == 1 and OW == 1:
        # Intended use: kernel_size == spatial size -> one patch per example;
        # (c, h, w) flatten order == OIHW weight flatten. No transpose needed.
        patches = x.reshape(N, D)
    else:
        # General case: one XLA patch-extraction op, channels-last output so
        # no NHWC<->NCHW transpose round-trip is materialized in HBM.
        # TODO(synk): build the (tr, D) im2col tile inside the kernel from a
        # VMEM-resident x block (pl.ds windows) to avoid the KH*KW-fold HBM
        # blow-up for large OH*OW.
        p = lax.conv_general_dilated_patches(
            x, (KH, KW), (1, 1), "VALID",
            dimension_numbers=("NCHW", "OIHW", "NHWC"))      # (N, OH, OW, D)
        patches = p.reshape(N * OH * OW, D)

    out = _pallas_matmul_bias(patches, params["w_p"], params["b_p"], M, D)

    if OH == 1 and OW == 1:
        # conv output would be (N, M, 1, 1); torch squeeze + view(-1, nc, 2)
        # is exactly a reshape of the (N, M) matmul result.
        return out.reshape(-1, num_classes, 2)

    out = out.reshape(N, OH, OW, M).transpose(0, 3, 1, 2)    # (N, M, OH, OW)
    out = jnp.squeeze(out)
    return out.reshape(-1, num_classes, 2)


# ------------------------------- reference -------------------------------- #
def _reference(x, weight, bias, num_classes):
    x_cat = jnp.concatenate([x] * num_classes, axis=1)
    y = lax.conv_general_dilated(
        x_cat, weight, window_strides=(1, 1), padding="VALID",
        dimension_numbers=("NCHW", "OIHW", "NCHW"),
        feature_group_count=num_classes)
    y = y + bias.reshape(1, -1, 1, 1)
    y = jnp.squeeze(y)
    return y.reshape(-1, num_classes, 2)


if __name__ == "__main__":
    num_classes = 4
    N, Cx, H, W = 2, 4, 16, 16
    K = 16                               # intended use: kernel_size == H == W
    in_ch = num_classes * Cx             # Conv2d's declared in_channels

    key = jax.random.PRNGKey(0)
    kx, kw, kb = jax.random.split(key, 3)

    x = jax.random.normal(kx, (N, Cx, H, W), dtype=jnp.float32)
    weight = jax.random.normal(kw, (num_classes * 2, in_ch // num_classes, K, K),
                               dtype=jnp.float32) * 0.05
    bias = jax.random.normal(kb, (num_classes * 2,), dtype=jnp.float32) * 0.05

    ref = jax.block_until_ready(_reference(x, weight, bias, num_classes))

    # Exact (f32) path, intended use (K == H == W -> 1x1 conv output).
    p32 = prepare_multitask_params(weight, bias, num_classes,
                                   compute_dtype=jnp.float32)
    out = jax.block_until_ready(multitask_block_forward(x, p32))
    assert out.shape == (N, num_classes, 2), out.shape
    assert jnp.allclose(out, ref, atol=5e-4, rtol=5e-4), \
        float(jnp.max(jnp.abs(out - ref)))

    # Default bf16 compute path (f32 accumulation) -> looser tolerance.
    pbf = prepare_multitask_params(weight, bias, num_classes)
    out_bf = jax.block_until_ready(multitask_block_forward(x, pbf))
    assert out_bf.shape == (N, num_classes, 2), out_bf.shape
    assert jnp.allclose(out_bf, ref, atol=1e-1, rtol=1e-1), \
        float(jnp.max(jnp.abs(out_bf - ref)))

    # General path (K < H -> OH*OW > 1), exercises the patch-extraction glue.
    K2 = 8
    w2 = jax.random.normal(kw, (num_classes * 2, in_ch // num_classes, K2, K2),
                           dtype=jnp.float32) * 0.05
    p2 = prepare_multitask_params(w2, bias, num_classes,
                                  compute_dtype=jnp.float32)
    out2 = jax.block_until_ready(multitask_block_forward(x, p2))
    ref2 = jax.block_until_ready(_reference(x, w2, bias, num_classes))
    assert out2.shape == ref2.shape, (out2.shape, ref2.shape)
    assert jnp.allclose(out2, ref2, atol=5e-4, rtol=5e-4), \
        float(jnp.max(jnp.abs(out2 - ref2)))

    print("KERNEL_OK")
</pallas_src>

<mosaic_0001>
module attributes {stable_mosaic.version = 11 : i64} {
  func.func @_mtl_matmul_kernel(%arg0: i32, %arg1: memref<8x1024xf32, #tpu.memory_space<vmem>>, %arg2: memref<1024x128xf32, #tpu.memory_space<vmem>>, %arg3: memref<1x128xf32, #tpu.memory_space<vmem>>, %arg4: memref<8x128xf32, #tpu.memory_space<vmem>>) attributes {dimension_semantics = [#tpu.dimension_semantics<parallel>], iteration_bounds = array<i64: 1>, scalar_prefetch = 0 : i64, scratch_operands = 0 : i64, tpu.core_type = #tpu.core_type<tc>, window_params = [{transform_indices = @transform_0, window_bounds = array<i64: 8, 1024>}, {pipeline_mode = #tpu.pipeline_mode<synchronous>, transform_indices = @transform_1, window_bounds = array<i64: 1024, 128>}, {pipeline_mode = #tpu.pipeline_mode<synchronous>, transform_indices = @transform_2, window_bounds = array<i64: 1, 128>}, {transform_indices = @transform_3, window_bounds = array<i64: 8, 128>}]} {
    %c0 = arith.constant 0 : index
    %c0_0 = arith.constant 0 : index
    %0 = vector.load %arg1[%c0, %c0_0] : memref<8x1024xf32, #tpu.memory_space<vmem>>, vector<8x1024xf32>
    %c0_1 = arith.constant 0 : index
    %c0_2 = arith.constant 0 : index
    %1 = vector.load %arg2[%c0_1, %c0_2] : memref<1024x128xf32, #tpu.memory_space<vmem>>, vector<1024x128xf32>
    %cst = arith.constant dense<0.000000e+00> : vector<8x128xf32>
    %2 = tpu.matmul %0, %1, %cst {dimension_numbers = #tpu.dot_dimension_numbers<[1], [0], [0], [1], [0, 0, 1, 1], [], []>} : vector<8x1024xf32>, vector<1024x128xf32>, vector<8x128xf32> -> vector<8x128xf32>
    %c0_3 = arith.constant 0 : index
    %c0_4 = arith.constant 0 : index
    %3 = vector.load %arg3[%c0_3, %c0_4] : memref<1x128xf32, #tpu.memory_space<vmem>>, vector<1x128xf32>
    %4 = vector.broadcast %3 : vector<1x128xf32> to vector<8x128xf32>
    %5 = arith.addf %2, %4 : vector<8x128xf32>
    %c0_5 = arith.constant 0 : index
    %c0_6 = arith.constant 0 : index
    %6 = vector.load %arg4[%c0_5, %c0_6] : memref<8x128xf32, #tpu.memory_space<vmem>>, vector<8x128xf32>
    tpu.vector_store %arg4[%c0_5, %c0_6], %5 {strides = array<i32>} : memref<8x128xf32, #tpu.memory_space<vmem>>, vector<8x128xf32>,
    return
  }
  func.func @transform_0(%arg0: i32) -> (i32, i32) {
    %c0_i32 = arith.constant 0 : i32
    %c0_i32_0 = arith.constant 0 : i32
    return %arg0, %c0_i32 : i32, i32
  }
  func.func @transform_1(%arg0: i32) -> (i32, i32) {
    %c0_i32 = arith.constant 0 : i32
    %c0_i32_0 = arith.constant 0 : i32
    %c0_i32_1 = arith.constant 0 : i32
    return %c0_i32, %c0_i32_0 : i32, i32
  }
  func.func @transform_2(%arg0: i32) -> (i32, i32) {
    %c0_i32 = arith.constant 0 : i32
    %c0_i32_0 = arith.constant 0 : i32
    %c0_i32_1 = arith.constant 0 : i32
    return %c0_i32, %c0_i32_0 : i32, i32
  }
  func.func @transform_3(%arg0: i32) -> (i32, i32) {
    %c0_i32 = arith.constant 0 : i32
    %c0_i32_0 = arith.constant 0 : i32
    return %arg0, %c0_i32 : i32, i32
  }
}

</mosaic_0001>

<llo_original>
// kernel: tpu_custom_call.1
$region0: #{tpu_custom_call.1}
  #allocation0 [shape = 'u32[]', space=smem, size = 0x4, offset = 0x4, fixed_abs, tag = 'smem constant byte address 0x4 - core index']
  #allocation1 [shape = 'u32[144,128]{1,0:T(1,128)}', space=vmem, size = 0x12000, scoped, tag = 'internal scratch']
  %s0 = inlined_call_operand.hbm [shape: f32[8,1024], index: 0, kind: input, shape index: {}]
  %s1 = inlined_call_operand.hbm [shape: f32[1024,128], index: 1, kind: input, shape index: {}]
  %s2 = inlined_call_operand.vmem [shape: f32[1,128], index: 2, kind: input, shape index: {}]
  %s3 = inlined_call_operand.hbm [shape: f32[8,128], index: 3, kind: output, shape index: {}]
  %s4 = sld [smem:[#allocation0]]
  $region30: #{tpu_custom_call.1} parent=0
    _
  %s6 = ssub.s32 1, %s4
  %s7 = scalar_select 0, %s6, %s4
  $region1: #{tpu_custom_call.1} parent=0
    #allocation2 [shape = 'u8[32768]{0}', space=vmem, size = 0x8000, scoped, tag = 'input window, operand 0, single buffered']
    #allocation3 [shape = 's32[1]{0}', space=sflag, size = 0x4, scoped, tag = 'scoped memory for tpu_custom_call.1']
    #allocation4 [shape = 's32[1]{0}', space=sflag, size = 0x4, scoped, tag = 'scoped memory for tpu_custom_call.1']
    #allocation5 [shape = 'u8[524288]{0}', space=vmem, size = 0x80000, scoped, tag = 'input window, operand 1, single buffered']
    #allocation6 [shape = 's32[1]{0}', space=sflag, size = 0x4, scoped, tag = 'scoped memory for tpu_custom_call.1']
    #allocation7 [shape = 'u8[4096]{0}', space=vmem, size = 0x1000, scoped, tag = 'output window, operand 0, single buffered']
    %8 = vsyncpa [#allocation3], 0
    %9 = vsyncpa [#allocation6], 0
    %10 = vsyncpa [#allocation4], 0
    // Predicated region
    $region2: #{tpu_custom_call.1} parent=1 // pred_check
      _
    $region3: #{tpu_custom_call.1} parent=1 // pred_check_branch
      %12 = sbr.rel (0) target = $region5
    $region4: #{tpu_custom_call.1} parent=1 // pred_region
      %s14 = ssub.s32 1024, 1024
      %15 = vsyncadd [#allocation3], %s14
      %s17 = sshll.u32 [#allocation2], 4
      %s18 = int_to_ptr.vmem [resolvable:$true] %s17
      %20 = dma.hbm_to_vmem [thread:$0]  %s0, 1024, %s18, [#allocation3]
    $region5: #{tpu_custom_call.1} parent=1 // pred_fallthru
      _
    // Predicated region
    $region6: #{tpu_custom_call.1} parent=1 // pred_check
      _
    $region7: #{tpu_custom_call.1} parent=1 // pred_check_branch
      %22 = sbr.rel (0) target = $region9
    $region8: #{tpu_custom_call.1} parent=1 // pred_region
      %s24 = ssub.s32 16384, 16384
      %25 = vsyncadd [#allocation6], %s24
      %s26 = sshll.u32 [#allocation5], 4
      %s27 = int_to_ptr.vmem [resolvable:$true] %s26
      %32 = dma.hbm_to_vmem [thread:$0]  %s1, 16384, %s27, [#allocation6], 128, 128, 8
    $region9: #{tpu_custom_call.1} parent=1 // pred_fallthru
      _
    // Predicated region
    $region10: #{tpu_custom_call.1} parent=1 // pred_check
      _
    $region11: #{tpu_custom_call.1} parent=1 // pred_check_branch
      %34 = sbr.rel (0) target = $region13
    $region12: #{tpu_custom_call.1} parent=1 // pred_region
      _
    $region13: #{tpu_custom_call.1} parent=1 // pred_fallthru
      _
    // Predicated region
    $region14: #{tpu_custom_call.1} parent=1 // pred_check
      _
    $region15: #{tpu_custom_call.1} parent=1 // pred_check_branch
      %36 = sbr.rel (0) target = $region17
    $region16: #{tpu_custom_call.1} parent=1 // pred_region
      %37 = dma.done [#allocation3], 1024
    $region17: #{tpu_custom_call.1} parent=1 // pred_fallthru
      _
    // Predicated region
    $region18: #{tpu_custom_call.1} parent=1 // pred_check
      _
    $region19: #{tpu_custom_call.1} parent=1 // pred_check_branch
      %39 = sbr.rel (0) target = $region21
    $region20: #{tpu_custom_call.1} parent=1 // pred_region
      %40 = dma.done [#allocation6], 16384
    $region21: #{tpu_custom_call.1} parent=1 // pred_fallthru
      _
    %v41 = vld [vmem:[#allocation2] sm:$0xff]
    %v42 = vld [vmem:[#allocation2 + $0x8] sm:$0xff]
    %v43 = vld [vmem:[#allocation2 + $0x10] sm:$0xff]
    %v44 = vld [vmem:[#allocation2 + $0x18] sm:$0xff]
    %v45 = vld [vmem:[#allocation2 + $0x20] sm:$0xff]
    %v46 = vld [vmem:[#allocation2 + $0x28] sm:$0xff]
    %v47 = vld [vmem:[#allocation2 + $0x30] sm:$0xff]
    %v48 = vld [vmem:[#allocation2 + $0x38] sm:$0xff]
    %v49 = vld [vmem:[#allocation5] sm:$0xff]
    %v50 = vld [vmem:[#allocation5 + $0x8] sm:$0xff]
    %v51 = vld [vmem:[#allocation5 + $0x10] sm:$0xff]
    %v52 = vld [vmem:[#allocation5 + $0x18] sm:$0xff]
    %v53 = vld [vmem:[#allocation5 + $0x20] sm:$0xff]
    %v54 = vld [vmem:[#allocation5 + $0x28] sm:$0xff]
    %v55 = vld [vmem:[#allocation5 + $0x30] sm:$0xff]
    %v56 = vld [vmem:[#allocation5 + $0x38] sm:$0xff]
    %v57 = vld [vmem:[#allocation5 + $0x40] sm:$0xff]
    %v58 = vld [vmem:[#allocation5 + $0x48] sm:$0xff]
    %v59 = vld [vmem:[#allocation5 + $0x50] sm:$0xff]
    %v60 = vld [vmem:[#allocation5 + $0x58] sm:$0xff]
    %v61 = vld [vmem:[#allocation5 + $0x60] sm:$0xff]
    %v62 = vld [vmem:[#allocation5 + $0x68] sm:$0xff]
    %v63 = vld [vmem:[#allocation5 + $0x70] sm:$0xff]
    %v64 = vld [vmem:[#allocation5 + $0x78] sm:$0xff]
    %v65 = vld [vmem:[#allocation5 + $0x80] sm:$0xff]
    %v66 = vld [vmem:[#allocation5 + $0x88] sm:$0xff]
    %v67 = vld [vmem:[#allocation5 + $0x90] sm:$0xff]
    %v68 = vld [vmem:[#allocation5 + $0x98] sm:$0xff]
    %v69 = vld [vmem:[#allocation5 + $0xa0] sm:$0xff]
    %v70 = vld [vmem:[#allocation5 + $0xa8] sm:$0xff]
    %v71 = vld [vmem:[#allocation5 + $0xb0] sm:$0xff]
    %v72 = vld [vmem:[#allocation5 + $0xb8] sm:$0xff]
    %v73 = vld [vmem:[#allocation5 + $0xc0] sm:$0xff]
    %v74 = vld [vmem:[#allocation5 + $0xc8] sm:$0xff]
    %v75 = vld [vmem:[#allocation5 + $0xd0] sm:$0xff]
    %v76 = vld [vmem:[#allocation5 + $0xd8] sm:$0xff]
    %v77 = vld [vmem:[#allocation5 + $0xe0] sm:$0xff]
    %v78 = vld [vmem:[#allocation5 + $0xe8] sm:$0xff]
    %v79 = vld [vmem:[#allocation5 + $0xf0] sm:$0xff]
    %v80 = vld [vmem:[#allocation5 + $0xf8] sm:$0xff]
    %v81 = vld [vmem:[#allocation5 + $0x100] sm:$0xff]
    %v82 = vld [vmem:[#allocation5 + $0x108] sm:$0xff]
    %v83 = vld [vmem:[#allocation5 + $0x110] sm:$0xff]
    %v84 = vld [vmem:[#allocation5 + $0x118] sm:$0xff]
    %v85 = vld [vmem:[#allocation5 + $0x120] sm:$0xff]
    %v86 = vld [vmem:[#allocation5 + $0x128] sm:$0xff]
    %v87 = vld [vmem:[#allocation5 + $0x130] sm:$0xff]
    %v88 = vld [vmem:[#allocation5 + $0x138] sm:$0xff]
    %v89 = vld [vmem:[#allocation5 + $0x140] sm:$0xff]
    %v90 = vld [vmem:[#allocation5 + $0x148] sm:$0xff]
    %v91 = vld [vmem:[#allocation5 + $0x150] sm:$0xff]
    %v92 = vld [vmem:[#allocation5 + $0x158] sm:$0xff]
    %v93 = vld [vmem:[#allocation5 + $0x160] sm:$0xff]
    %v94 = vld [vmem:[#allocation5 + $0x168] sm:$0xff]
    %v95 = vld [vmem:[#allocation5 + $0x170] sm:$0xff]
    %v96 = vld [vmem:[#allocation5 + $0x178] sm:$0xff]
    %v97 = vld [vmem:[#allocation5 + $0x180] sm:$0xff]
    %v98 = vld [vmem:[#allocation5 + $0x188] sm:$0xff]
    %v99 = vld [vmem:[#allocation5 + $0x190] sm:$0xff]
    %v100 = vld [vmem:[#allocation5 + $0x198] sm:$0xff]
    %v101 = vld [vmem:[#allocation5 + $0x1a0] sm:$0xff]
    %v102 = vld [vmem:[#allocation5 + $0x1a8] sm:$0xff]
    %v103 = vld [vmem:[#allocation5 + $0x1b0] sm:$0xff]
    %v104 = vld [vmem:[#allocation5 + $0x1b8] sm:$0xff]
    %v105 = vld [vmem:[#allocation5 + $0x1c0] sm:$0xff]
    %v106 = vld [vmem:[#allocation5 + $0x1c8] sm:$0xff]
    %v107 = vld [vmem:[#allocation5 + $0x1d0] sm:$0xff]
    %v108 = vld [vmem:[#allocation5 + $0x1d8] sm:$0xff]
    %v109 = vld [vmem:[#allocation5 + $0x1e0] sm:$0xff]
    %v110 = vld [vmem:[#allocation5 + $0x1e8] sm:$0xff]
    %v111 = vld [vmem:[#allocation5 + $0x1f0] sm:$0xff]
    %v112 = vld [vmem:[#allocation5 + $0x1f8] sm:$0xff]
    %v113 = vld [vmem:[#allocation5 + $0x200] sm:$0xff]
    %v114 = vld [vmem:[#allocation5 + $0x208] sm:$0xff]
    %v115 = vld [vmem:[#allocation5 + $0x210] sm:$0xff]
    %v116 = vld [vmem:[#allocation5 + $0x218] sm:$0xff]
    %v117 = vld [vmem:[#allocation5 + $0x220] sm:$0xff]
    %v118 = vld [vmem:[#allocation5 + $0x228] sm:$0xff]
    %v119 = vld [vmem:[#allocation5 + $0x230] sm:$0xff]
    %v120 = vld [vmem:[#allocation5 + $0x238] sm:$0xff]
    %v121 = vld [vmem:[#allocation5 + $0x240] sm:$0xff]
    %v122 = vld [vmem:[#allocation5 + $0x248] sm:$0xff]
    %v123 = vld [vmem:[#allocation5 + $0x250] sm:$0xff]
    %v124 = vld [vmem:[#allocation5 + $0x258] sm:$0xff]
    %v125 = vld [vmem:[#allocation5 + $0x260] sm:$0xff]
    %v126 = vld [vmem:[#allocation5 + $0x268] sm:$0xff]
    %v127 = vld [vmem:[#allocation5 + $0x270] sm:$0xff]
    %v128 = vld [vmem:[#allocation5 + $0x278] sm:$0xff]
    %v129 = vld [vmem:[#allocation5 + $0x280] sm:$0xff]
    %v130 = vld [vmem:[#allocation5 + $0x288] sm:$0xff]
    %v131 = vld [vmem:[#allocation5 + $0x290] sm:$0xff]
    %v132 = vld [vmem:[#allocation5 + $0x298] sm:$0xff]
    %v133 = vld [vmem:[#allocation5 + $0x2a0] sm:$0xff]
    %v134 = vld [vmem:[#allocation5 + $0x2a8] sm:$0xff]
    %v135 = vld [vmem:[#allocation5 + $0x2b0] sm:$0xff]
    %v136 = vld [vmem:[#allocation5 + $0x2b8] sm:$0xff]
    %v137 = vld [vmem:[#allocation5 + $0x2c0] sm:$0xff]
    %v138 = vld [vmem:[#allocation5 + $0x2c8] sm:$0xff]
    %v139 = vld [vmem:[#allocation5 + $0x2d0] sm:$0xff]
    %v140 = vld [vmem:[#allocation5 + $0x2d8] sm:$0xff]
    %v141 = vld [vmem:[#allocation5 + $0x2e0] sm:$0xff]
    %v142 = vld [vmem:[#allocation5 + $0x2e8] sm:$0xff]
    %v143 = vld [vmem:[#allocation5 + $0x2f0] sm:$0xff]
    %v144 = vld [vmem:[#allocation5 + $0x2f8] sm:$0xff]
    %v145 = vld [vmem:[#allocation5 + $0x300] sm:$0xff]
    %v146 = vld [vmem:[#allocation5 + $0x308] sm:$0xff]
    %v147 = vld [vmem:[#allocation5 + $0x310] sm:$0xff]
    %v148 = vld [vmem:[#allocation5 + $0x318] sm:$0xff]
    %v149 = vld [vmem:[#allocation5 + $0x320] sm:$0xff]
    %v150 = vld [vmem:[#allocation5 + $0x328] sm:$0xff]
    %v151 = vld [vmem:[#allocation5 + $0x330] sm:$0xff]
    %v152 = vld [vmem:[#allocation5 + $0x338] sm:$0xff]
    %v153 = vld [vmem:[#allocation5 + $0x340] sm:$0xff]
    %v154 = vld [vmem:[#allocation5 + $0x348] sm:$0xff]
    %v155 = vld [vmem:[#allocation5 + $0x350] sm:$0xff]
    %v156 = vld [vmem:[#allocation5 + $0x358] sm:$0xff]
    %v157 = vld [vmem:[#allocation5 + $0x360] sm:$0xff]
    %v158 = vld [vmem:[#allocation5 + $0x368] sm:$0xff]
    %v159 = vld [vmem:[#allocation5 + $0x370] sm:$0xff]
    %v160 = vld [vmem:[#allocation5 + $0x378] sm:$0xff]
    %v161 = vld [vmem:[#allocation5 + $0x380] sm:$0xff]
    %v162 = vld [vmem:[#allocation5 + $0x388] sm:$0xff]
    %v163 = vld [vmem:[#allocation5 + $0x390] sm:$0xff]
    %v164 = vld [vmem:[#allocation5 + $0x398] sm:$0xff]
    %v165 = vld [vmem:[#allocation5 + $0x3a0] sm:$0xff]
    %v166 = vld [vmem:[#allocation5 + $0x3a8] sm:$0xff]
    %v167 = vld [vmem:[#allocation5 + $0x3b0] sm:$0xff]
    %v168 = vld [vmem:[#allocation5 + $0x3b8] sm:$0xff]
    %v169 = vld [vmem:[#allocation5 + $0x3c0] sm:$0xff]
    %v170 = vld [vmem:[#allocation5 + $0x3c8] sm:$0xff]
    %v171 = vld [vmem:[#allocation5 + $0x3d0] sm:$0xff]
    %v172 = vld [vmem:[#allocation5 + $0x3d8] sm:$0xff]
    %v173 = vld [vmem:[#allocation5 + $0x3e0] sm:$0xff]
    %v174 = vld [vmem:[#allocation5 + $0x3e8] sm:$0xff]
    %v175 = vld [vmem:[#allocation5 + $0x3f0] sm:$0xff]
    %v176 = vld [vmem:[#allocation5 + $0x3f8] sm:$0xff]
    %v177 = vld [vmem:[%s2] sm:$0x1]
    %v179 = vlaneseq
    %v180 = vshrl.u32 %v179, 7
    %v181 = vsub.s32 0, %v180
    %v182 = vrot.slane %v177, %v181
    %184 = vmatprep.subr.mxu0 0.0
    %185 = vmatpush1.msra.mxu0 %v64
    %186 = vmatprep.subr.mxu0 0.0
    %187 = vmatpush1.msra.mxu0 %v63
    %188 = vmatprep.subr.mxu0 0.0
    %189 = vmatpush1.msra.mxu0 %v62
    %190 = vmatprep.subr.mxu0 0.0
    %191 = vmatpush1.msra.mxu0 %v61
    %192 = vmatprep.subr.mxu0 0.0
    %193 = vmatpush1.msra.mxu0 %v60
    %194 = vmatprep.subr.mxu0 0.0
    %195 = vmatpush1.msra.mxu0 %v59
    %196 = vmatprep.subr.mxu0 0.0
    %197 = vmatpush1.msra.mxu0 %v58
    %198 = vmatprep.subr.mxu0 0.0
    %199 = vmatpush1.msra.mxu0 %v57
    %200 = vmatprep.subr.mxu0 0.0
    %201 = vmatpush1.msra.mxu0 %v56
    %202 = vmatprep.subr.mxu0 0.0
    %203 = vmatpush1.msra.mxu0 %v55
    %204 = vmatprep.subr.mxu0 0.0
    %205 = vmatpush1.msra.mxu0 %v54
    %206 = vmatprep.subr.mxu0 0.0
    %207 = vmatpush1.msra.mxu0 %v53
    %208 = vmatprep.subr.mxu0 0.0
    %209 = vmatpush1.msra.mxu0 %v52
    %210 = vmatprep.subr.mxu0 0.0
    %211 = vmatpush1.msra.mxu0 %v51
    %212 = vmatprep.subr.mxu0 0.0
    %213 = vmatpush1.msra.mxu0 %v50
    %214 = vmatprep.subr.mxu0 0.0
    %215 = vmatpush1.msra.mxu0 %v49
    %216 = vmatprep.subr.mxu0 0.0
    %217 = vmatpush2.msra.mxu0 %v80
    %218 = vmatprep.subr.mxu0 0.0
    %219 = vmatpush2.msra.mxu0 %v79
    %220 = vmatprep.subr.mxu0 0.0
    %221 = vmatpush2.msra.mxu0 %v78
    %222 = vmatprep.subr.mxu0 0.0
    %223 = vmatpush2.msra.mxu0 %v77
    %224 = vmatprep.subr.mxu0 0.0
    %225 = vmatpush2.msra.mxu0 %v76
    %226 = vmatprep.subr.mxu0 0.0
    %227 = vmatpush2.msra.mxu0 %v75
    %228 = vmatprep.subr.mxu0 0.0
    %229 = vmatpush2.msra.mxu0 %v74
    %230 = vmatprep.subr.mxu0 0.0
    %231 = vmatpush2.msra.mxu0 %v73
    %232 = vmatprep.subr.mxu0 0.0
    %233 = vmatpush2.msra.mxu0 %v72
    %234 = vmatprep.subr.mxu0 0.0
    %235 = vmatpush2.msra.mxu0 %v71
    %236 = vmatprep.subr.mxu0 0.0
    %237 = vmatpush2.msra.mxu0 %v70
    %238 = vmatprep.subr.mxu0 0.0
    %239 = vmatpush2.msra.mxu0 %v69
    %240 = vmatprep.subr.mxu0 0.0
    %241 = vmatpush2.msra.mxu0 %v68
    %242 = vmatprep.subr.mxu0 0.0
    %243 = vmatpush2.msra.mxu0 %v67
    %244 = vmatprep.subr.mxu0 0.0
    %245 = vmatpush2.msra.mxu0 %v66
    %246 = vmatprep.subr.mxu0 0.0
    %247 = vmatpush2.msra.mxu0 %v65
    %248 = vmatprep.mubr.f32.mxu0 %v42
    %249 = vmatmul.mubr.f32.gmra.mxu0 %v41
    %v250 = vpop.f32.mrf.mxu0
    %v251 = vadd.f32 %v182, %v250
    %v252 = vpop.f32.mrf.mxu0
    %253 = vdwg.mxu0
    %254 = vmatprep.subr.mxu0 0.0
    %255 = vmatpush1.msra.mxu0 %v96
    %256 = vmatprep.subr.mxu0 0.0
    %257 = vmatpush1.msra.mxu0 %v95
    %258 = vmatprep.subr.mxu0 0.0
    %259 = vmatpush1.msra.mxu0 %v94
    %260 = vmatprep.subr.mxu0 0.0
    %261 = vmatpush1.msra.mxu0 %v93
    %262 = vmatprep.subr.mxu0 0.0
    %263 = vmatpush1.msra.mxu0 %v92
    %264 = vmatprep.subr.mxu0 0.0
    %265 = vmatpush1.msra.mxu0 %v91
    %266 = vmatprep.subr.mxu0 0.0
    %267 = vmatpush1.msra.mxu0 %v90
    %268 = vmatprep.subr.mxu0 0.0
    %269 = vmatpush1.msra.mxu0 %v89
    %270 = vmatprep.subr.mxu0 0.0
    %271 = vmatpush1.msra.mxu0 %v88
    %272 = vmatprep.subr.mxu0 0.0
    %273 = vmatpush1.msra.mxu0 %v87
    %274 = vmatprep.subr.mxu0 0.0
    %275 = vmatpush1.msra.mxu0 %v86
    %276 = vmatprep.subr.mxu0 0.0
    %277 = vmatpush1.msra.mxu0 %v85
    %278 = vmatprep.subr.mxu0 0.0
    %279 = vmatpush1.msra.mxu0 %v84
    %280 = vmatprep.subr.mxu0 0.0
    %281 = vmatpush1.msra.mxu0 %v83
    %282 = vmatprep.subr.mxu0 0.0
    %283 = vmatpush1.msra.mxu0 %v82
    %284 = vmatprep.subr.mxu0 0.0
    %285 = vmatpush1.msra.mxu0 %v81
    %286 = vmatprep.subr.mxu0 0.0
    %287 = vmatpush2.msra.mxu0 %v112
    %288 = vmatprep.subr.mxu0 0.0
    %289 = vmatpush2.msra.mxu0 %v111
    %290 = vmatprep.subr.mxu0 0.0
    %291 = vmatpush2.msra.mxu0 %v110
    %292 = vmatprep.subr.mxu0 0.0
    %293 = vmatpush2.msra.mxu0 %v109
    %294 = vmatprep.subr.mxu0 0.0
    %295 = vmatpush2.msra.mxu0 %v108
    %296 = vmatprep.subr.mxu0 0.0
    %297 = vmatpush2.msra.mxu0 %v107
    %298 = vmatprep.subr.mxu0 0.0
    %299 = vmatpush2.msra.mxu0 %v106
    %300 = vmatprep.subr.mxu0 0.0
    %301 = vmatpush2.msra.mxu0 %v105
    %302 = vmatprep.subr.mxu0 0.0
    %303 = vmatpush2.msra.mxu0 %v104
    %304 = vmatprep.subr.mxu0 0.0
    %305 = vmatpush2.msra.mxu0 %v103
    %306 = vmatprep.subr.mxu0 0.0
    %307 = vmatpush2.msra.mxu0 %v102
    %308 = vmatprep.subr.mxu0 0.0
    %309 = vmatpush2.msra.mxu0 %v101
    %310 = vmatprep.subr.mxu0 0.0
    %311 = vmatpush2.msra.mxu0 %v100
    %312 = vmatprep.subr.mxu0 0.0
    %313 = vmatpush2.msra.mxu0 %v99
    %314 = vmatprep.subr.mxu0 0.0
    %315 = vmatpush2.msra.mxu0 %v98
    %316 = vmatprep.subr.mxu0 0.0
    %317 = vmatpush2.msra.mxu0 %v97
    %318 = vmatprep.mubr.f32.mxu0 %v44
    %319 = vmatmul.mubr.f32.gmra.mxu0 %v43
    %v320 = vpop.f32.mrf.mxu0
    %v321 = vadd.f32 %v251, %v320
    %v322 = vpop.f32.mrf.mxu0
    %323 = vdwg.mxu0
    %324 = vmatprep.subr.mxu0 0.0
    %325 = vmatpush1.msra.mxu0 %v128
    %326 = vmatprep.subr.mxu0 0.0
    %327 = vmatpush1.msra.mxu0 %v127
    %328 = vmatprep.subr.mxu0 0.0
    %329 = vmatpush1.msra.mxu0 %v126
    %330 = vmatprep.subr.mxu0 0.0
    %331 = vmatpush1.msra.mxu0 %v125
    %332 = vmatprep.subr.mxu0 0.0
    %333 = vmatpush1.msra.mxu0 %v124
    %334 = vmatprep.subr.mxu0 0.0
    %335 = vmatpush1.msra.mxu0 %v123
    %336 = vmatprep.subr.mxu0 0.0
    %337 = vmatpush1.msra.mxu0 %v122
    %338 = vmatprep.subr.mxu0 0.0
    %339 = vmatpush1.msra.mxu0 %v121
    %340 = vmatprep.subr.mxu0 0.0
    %341 = vmatpush1.msra.mxu0 %v120
    %342 = vmatprep.subr.mxu0 0.0
    %343 = vmatpush1.msra.mxu0 %v119
    %344 = vmatprep.subr.mxu0 0.0
    %345 = vmatpush1.msra.mxu0 %v118
    %346 = vmatprep.subr.mxu0 0.0
    %347 = vmatpush1.msra.mxu0 %v117
    %348 = vmatprep.subr.mxu0 0.0
    %349 = vmatpush1.msra.mxu0 %v116
    %350 = vmatprep.subr.mxu0 0.0
    %351 = vmatpush1.msra.mxu0 %v115
    %352 = vmatprep.subr.mxu0 0.0
    %353 = vmatpush1.msra.mxu0 %v114
    %354 = vmatprep.subr.mxu0 0.0
    %355 = vmatpush1.msra.mxu0 %v113
    %356 = vmatprep.subr.mxu0 0.0
    %357 = vmatpush2.msra.mxu0 %v144
    %358 = vmatprep.subr.mxu0 0.0
    %359 = vmatpush2.msra.mxu0 %v143
    %360 = vmatprep.subr.mxu0 0.0
    %361 = vmatpush2.msra.mxu0 %v142
    %362 = vmatprep.subr.mxu0 0.0
    %363 = vmatpush2.msra.mxu0 %v141
    %364 = vmatprep.subr.mxu0 0.0
    %365 = vmatpush2.msra.mxu0 %v140
    %366 = vmatprep.subr.mxu0 0.0
    %367 = vmatpush2.msra.mxu0 %v139
    %368 = vmatprep.subr.mxu0 0.0
    %369 = vmatpush2.msra.mxu0 %v138
    %370 = vmatprep.subr.mxu0 0.0
    %371 = vmatpush2.msra.mxu0 %v137
    %372 = vmatprep.subr.mxu0 0.0
    %373 = vmatpush2.msra.mxu0 %v136
    %374 = vmatprep.subr.mxu0 0.0
    %375 = vmatpush2.msra.mxu0 %v135
    %376 = vmatprep.subr.mxu0 0.0
    %377 = vmatpush2.msra.mxu0 %v134
    %378 = vmatprep.subr.mxu0 0.0
    %379 = vmatpush2.msra.mxu0 %v133
    %380 = vmatprep.subr.mxu0 0.0
    %381 = vmatpush2.msra.mxu0 %v132
    %382 = vmatprep.subr.mxu0 0.0
    %383 = vmatpush2.msra.mxu0 %v131
    %384 = vmatprep.subr.mxu0 0.0
    %385 = vmatpush2.msra.mxu0 %v130
    %386 = vmatprep.subr.mxu0 0.0
    %387 = vmatpush2.msra.mxu0 %v129
    %388 = vmatprep.mubr.f32.mxu0 %v46
    %389 = vmatmul.mubr.f32.gmra.mxu0 %v45
    %v390 = vpop.f32.mrf.mxu0
    %v391 = vadd.f32 %v321, %v390
    %v392 = vpop.f32.mrf.mxu0
    %393 = vdwg.mxu0
    %394 = vmatprep.subr.mxu0 0.0
    %395 = vmatpush1.msra.mxu0 %v160
    %396 = vmatprep.subr.mxu0 0.0
    %397 = vmatpush1.msra.mxu0 %v159
    %398 = vmatprep.subr.mxu0 0.0
    %399 = vmatpush1.msra.mxu0 %v158
    %400 = vmatprep.subr.mxu0 0.0
    %401 = vmatpush1.msra.mxu0 %v157
    %402 = vmatprep.subr.mxu0 0.0
    %403 = vmatpush1.msra.mxu0 %v156
    %404 = vmatprep.subr.mxu0 0.0
    %405 = vmatpush1.msra.mxu0 %v155
    %406 = vmatprep.subr.mxu0 0.0
    %407 = vmatpush1.msra.mxu0 %v154
    %408 = vmatprep.subr.mxu0 0.0
    %409 = vmatpush1.msra.mxu0 %v153
    %410 = vmatprep.subr.mxu0 0.0
    %411 = vmatpush1.msra.mxu0 %v152
    %412 = vmatprep.subr.mxu0 0.0
    %413 = vmatpush1.msra.mxu0 %v151
    %414 = vmatprep.subr.mxu0 0.0
    %415 = vmatpush1.msra.mxu0 %v150
    %416 = vmatprep.subr.mxu0 0.0
    %417 = vmatpush1.msra.mxu0 %v149
    %418 = vmatprep.subr.mxu0 0.0
    %419 = vmatpush1.msra.mxu0 %v148
    %420 = vmatprep.subr.mxu0 0.0
    %421 = vmatpush1.msra.mxu0 %v147
    %422 = vmatprep.subr.mxu0 0.0
    %423 = vmatpush1.msra.mxu0 %v146
    %424 = vmatprep.subr.mxu0 0.0
    %425 = vmatpush1.msra.mxu0 %v145
    %426 = vmatprep.subr.mxu0 0.0
    %427 = vmatpush2.msra.mxu0 %v176
    %428 = vmatprep.subr.mxu0 0.0
    %429 = vmatpush2.msra.mxu0 %v175
    %430 = vmatprep.subr.mxu0 0.0
    %431 = vmatpush2.msra.mxu0 %v174
    %432 = vmatprep.subr.mxu0 0.0
    %433 = vmatpush2.msra.mxu0 %v173
    %434 = vmatprep.subr.mxu0 0.0
    %435 = vmatpush2.msra.mxu0 %v172
    %436 = vmatprep.subr.mxu0 0.0
    %437 = vmatpush2.msra.mxu0 %v171
    %438 = vmatprep.subr.mxu0 0.0
    %439 = vmatpush2.msra.mxu0 %v170
    %440 = vmatprep.subr.mxu0 0.0
    %441 = vmatpush2.msra.mxu0 %v169
    %442 = vmatprep.subr.mxu0 0.0
    %443 = vmatpush2.msra.mxu0 %v168
    %444 = vmatprep.subr.mxu0 0.0
    %445 = vmatpush2.msra.mxu0 %v167
    %446 = vmatprep.subr.mxu0 0.0
    %447 = vmatpush2.msra.mxu0 %v166
    %448 = vmatprep.subr.mxu0 0.0
    %449 = vmatpush2.msra.mxu0 %v165
    %450 = vmatprep.subr.mxu0 0.0
    %451 = vmatpush2.msra.mxu0 %v164
    %452 = vmatprep.subr.mxu0 0.0
    %453 = vmatpush2.msra.mxu0 %v163
    %454 = vmatprep.subr.mxu0 0.0
    %455 = vmatpush2.msra.mxu0 %v162
    %456 = vmatprep.subr.mxu0 0.0
    %457 = vmatpush2.msra.mxu0 %v161
    %458 = vmatprep.mubr.f32.mxu0 %v48
    %459 = vmatmul.mubr.f32.gmra.mxu0 %v47
    %v460 = vpop.f32.mrf.mxu0
    %v461 = vadd.f32 %v391, %v460
    %v462 = vpop.f32.mrf.mxu0
    %463 = vdwg.mxu0
    %464 = vst [vmem:[#allocation7] sm:$0xff] %v461
    // Predicated region
    $region22: #{tpu_custom_call.1} parent=1 // pred_check
      _
    $region23: #{tpu_custom_call.1} parent=1 // pred_check_branch
      %466 = sbr.rel (0) target = $region25
    $region24: #{tpu_custom_call.1} parent=1 // pred_region
      %s468 = ssub.s32 128, 128
      %469 = vsyncadd [#allocation4], %s468
      %s471 = sshll.u32 [#allocation7], 4
      %s472 = int_to_ptr.vmem [resolvable:$true] %s471
      %474 = dma.vmem_to_hbm [thread:$0]  %s472, 128, %s3, [#allocation4]
    $region25: #{tpu_custom_call.1} parent=1 // pred_fallthru
      _
    // Predicated region
    $region26: #{tpu_custom_call.1} parent=1 // pred_check
      _
    $region27: #{tpu_custom_call.1} parent=1 // pred_check_branch
      %476 = sbr.rel (0) target = $region29
    $region28: #{tpu_custom_call.1} parent=1 // pred_region
      %477 = dma.done [#allocation4], 128
    $region29: #{tpu_custom_call.1} parent=1 // pred_fallthru
      _
    %478 = vsyncpa [#allocation3], 1
    %479 = vsyncpa [#allocation6], 1
    %480 = vsyncpa [#allocation4], 1

</llo_original>
